<compile_context>
chip_gen: v7x
topology: tpu7x:2x2x1
jax: 0.10.0
libtpu: 0.0.40
codegen_flags: <defaults>
</compile_context>

<pallas_src>
import functools

import jax
import jax.numpy as jnp
from jax.experimental import pallas as pl
from jax.experimental.pallas import tpu as pltpu


def _attention_kernel(q_ref, c_ref, win_ref, wout_ref, out_ref, attn_ref, *,
                      s_real):
    # q_ref:   (Bt, L, D)       c_ref:    (Bt, S_pad, D)
    # win_ref: (D, D)           wout_ref: (2D, D)
    # out_ref: (Bt, L, D)       attn_ref: (Bt, L, S_pad)
    Bt, L, D = q_ref.shape
    S_pad = c_ref.shape[1]

    q = q_ref[...]          # (Bt, L, D)
    c = c_ref[...]          # (Bt, S_pad, D)

    # linear_in (no bias) as one flattened (Bt*L, D) @ (D, D) MXU matmul.
    q_flat = q.reshape(Bt * L, D)
    qg_flat = jnp.dot(q_flat, win_ref[...], preferred_element_type=jnp.float32)
    qg = qg_flat.reshape(Bt, L, D)

    # attention scores: batched contraction over D (no materialized transpose).
    scores = jax.lax.dot_general(
        qg, c, dimension_numbers=(((2,), (2,)), ((0,), (0,))),
        preferred_element_type=jnp.float32)               # (Bt, L, S_pad)

    # Mask the zero-padded context columns so softmax stays per real row.
    if S_pad > s_real:
        col = jax.lax.broadcasted_iota(jnp.int32, (Bt, L, S_pad), 2)
        scores = jnp.where(col < s_real, scores, -1e30)

    # Numerically stable softmax; reciprocal on the EUP (approx) is ~free.
    m = jnp.max(scores, axis=-1, keepdims=True)
    e = jnp.exp(scores - m)
    denom = jnp.sum(e, axis=-1, keepdims=True)
    w = e * pl.reciprocal(denom, approx=True)             # (Bt, L, S_pad)

    # mix = weights @ context (batched).
    mix = jax.lax.dot_general(
        w, c, dimension_numbers=(((2,), (1,)), ((0,), (0,))),
        preferred_element_type=jnp.float32)               # (Bt, L, D)

    # linear_out(concat([mix, qg])) == mix @ w_out[:D] + qg @ w_out[D:]
    mix_flat = mix.reshape(Bt * L, D)
    o_flat = (jnp.dot(mix_flat, wout_ref[0:D, :],
                      preferred_element_type=jnp.float32)
              + jnp.dot(qg_flat, wout_ref[D:2 * D, :],
                        preferred_element_type=jnp.float32))

    out_ref[...] = jnp.tanh(o_flat).reshape(Bt, L, D).astype(out_ref.dtype)
    attn_ref[...] = w.astype(attn_ref.dtype)


def attention_pallas(query, context, w_in, w_out, *, block_b=None):
    B, L, D = query.shape
    S = context.shape[1]

    # Batch-block size: amortize the ~0.35us/step grid overhead and feed the
    # MXU bigger tiles (aim for ~128 effective rows per step). For larger B
    # this still leaves multiple "parallel" grid steps (v7x: 2 TensorCores).
    if block_b is None:
        block_b = max(1, min(B, 128 // max(L, 1)))
    block_b = max(1, min(block_b, B))

    # Pad batch to a multiple of block_b; pad query_len to a multiple of 128
    # so the attention-weights store is lane-dense (unmasked vst).
    B_pad = pl.cdiv(B, block_b) * block_b
    S_pad = pl.cdiv(S, 128) * 128

    q_p = query
    c_p = context
    if B_pad != B:
        q_p = jnp.pad(q_p, ((0, B_pad - B), (0, 0), (0, 0)))
        c_p = jnp.pad(c_p, ((0, B_pad - B), (0, 0), (0, 0)))
    if S_pad != S:
        c_p = jnp.pad(c_p, ((0, 0), (0, S_pad - S), (0, 0)))

    grid = (B_pad // block_b,)

    # Advisory cost estimate for XLA scheduling around the custom call.
    flops = 6 * B * L * D * D + 4 * B * L * S * D
    transcendentals = B * L * S + B * L * D + B * L
    bytes_accessed = 4 * (2 * B * L * D + B * S * D + 3 * D * D + B * L * S)

    kernel = functools.partial(_attention_kernel, s_real=S)

    out, attn = pl.pallas_call(
        kernel,
        out_shape=(jax.ShapeDtypeStruct((B_pad, L, D), query.dtype),
                   jax.ShapeDtypeStruct((B_pad, L, S_pad), jnp.float32)),
        grid=grid,
        in_specs=[
            pl.BlockSpec((block_b, L, D), lambda b: (b, 0, 0)),
            pl.BlockSpec((block_b, S_pad, D), lambda b: (b, 0, 0)),
            pl.BlockSpec((D, D), lambda b: (0, 0)),
            pl.BlockSpec((2 * D, D), lambda b: (0, 0)),
        ],
        out_specs=(
            pl.BlockSpec((block_b, L, D), lambda b: (b, 0, 0)),
            pl.BlockSpec((block_b, L, S_pad), lambda b: (b, 0, 0)),
        ),
        compiler_params=pltpu.CompilerParams(
            dimension_semantics=("parallel",),
            # Explicit scoped-VMEM budget (v7x has only 64 MiB physical VMEM).
            vmem_limit_bytes=32 * 1024 * 1024,
        ),
        cost_estimate=pl.CostEstimate(
            flops=flops,
            transcendentals=transcendentals,
            bytes_accessed=bytes_accessed,
        ),
    )(q_p, c_p, w_in, w_out)

    return out[:B], attn[:B, :, :S]


def attention_ref(query, context, w_in, w_out):
    # Pure-JAX reference mirroring the PyTorch forward exactly.
    qg = jnp.einsum('bld,de->ble', query, w_in)
    scores = jnp.einsum('bld,bsd->bls', qg, context)
    weights = jax.nn.softmax(scores, axis=-1)
    mix = jnp.einsum('bls,bsd->bld', weights, context)
    combined = jnp.concatenate([mix, qg], axis=-1)
    out = jnp.tanh(jnp.einsum('blk,kd->bld', combined, w_out))
    return out, weights


if __name__ == "__main__":
    key = jax.random.PRNGKey(0)
    k_q, k_c, k_win, k_wout = jax.random.split(key, 4)

    B, L, S, D = 2, 8, 8, 32   # batch, output_len, query_len, dimensions

    query = jax.random.normal(k_q, (B, L, D), dtype=jnp.float32)
    context = jax.random.normal(k_c, (B, S, D), dtype=jnp.float32)
    # nn.Linear weight is (out, in); we store the transpose (in, out).
    w_in = jax.random.normal(k_win, (D, D), dtype=jnp.float32) * 0.1
    w_out = jax.random.normal(k_wout, (2 * D, D), dtype=jnp.float32) * 0.1

    out, attn_w = attention_pallas(query, context, w_in, w_out)
    jax.block_until_ready((out, attn_w))

    out_ref, attn_w_ref = attention_ref(query, context, w_in, w_out)
    # Slightly loosened tolerance: softmax uses the EUP approximate reciprocal
    # (~2^-12 relative error); everything else is f32-exact.
    assert jnp.allclose(out, out_ref, atol=2e-3, rtol=2e-3), \
        float(jnp.max(jnp.abs(out - out_ref)))
    assert jnp.allclose(attn_w, attn_w_ref, atol=2e-3, rtol=2e-3), \
        float(jnp.max(jnp.abs(attn_w - attn_w_ref)))

    print("KERNEL_OK")
</pallas_src>

<mosaic_0001>
module attributes {stable_mosaic.version = 11 : i64} {
  func.func @_attention_kernel(%arg0: i32, %arg1: memref<2x8x32xf32, #tpu.memory_space<vmem>>, %arg2: memref<2x128x32xf32, #tpu.memory_space<vmem>>, %arg3: memref<32x32xf32, #tpu.memory_space<vmem>>, %arg4: memref<64x32xf32, #tpu.memory_space<vmem>>, %arg5: memref<2x8x32xf32, #tpu.memory_space<vmem>>, %arg6: memref<2x8x128xf32, #tpu.memory_space<vmem>>) attributes {dimension_semantics = [#tpu.dimension_semantics<parallel>], iteration_bounds = array<i64: 1>, scalar_prefetch = 0 : i64, scratch_operands = 0 : i64, tpu.core_type = #tpu.core_type<tc>, window_params = [{transform_indices = @transform_0, window_bounds = array<i64: 2, 8, 32>}, {transform_indices = @transform_1, window_bounds = array<i64: 2, 128, 32>}, {pipeline_mode = #tpu.pipeline_mode<synchronous>, transform_indices = @transform_2, window_bounds = array<i64: 32, 32>}, {pipeline_mode = #tpu.pipeline_mode<synchronous>, transform_indices = @transform_3, window_bounds = array<i64: 64, 32>}, {transform_indices = @transform_4, window_bounds = array<i64: 2, 8, 32>}, {transform_indices = @transform_5, window_bounds = array<i64: 2, 8, 128>}]} {
    %c0 = arith.constant 0 : index
    %c0_0 = arith.constant 0 : index
    %c0_1 = arith.constant 0 : index
    %0 = vector.load %arg1[%c0, %c0_0, %c0_1] : memref<2x8x32xf32, #tpu.memory_space<vmem>>, vector<2x8x32xf32>
    %c0_2 = arith.constant 0 : index
    %c0_3 = arith.constant 0 : index
    %c0_4 = arith.constant 0 : index
    %1 = vector.load %arg2[%c0_2, %c0_3, %c0_4] : memref<2x128x32xf32, #tpu.memory_space<vmem>>, vector<2x128x32xf32>
    %2 = vector.shape_cast %0 : vector<2x8x32xf32> to vector<16x32xf32>
    %c0_5 = arith.constant 0 : index
    %c0_6 = arith.constant 0 : index
    %3 = vector.load %arg3[%c0_5, %c0_6] : memref<32x32xf32, #tpu.memory_space<vmem>>, vector<32x32xf32>
    %cst = arith.constant dense<0.000000e+00> : vector<16x32xf32>
    %4 = tpu.matmul %2, %3, %cst {dimension_numbers = #tpu.dot_dimension_numbers<[1], [0], [0], [1], [0, 0, 1, 1], [], []>} : vector<16x32xf32>, vector<32x32xf32>, vector<16x32xf32> -> vector<16x32xf32>
    %5 = vector.shape_cast %4 : vector<16x32xf32> to vector<2x8x32xf32>
    %cst_7 = arith.constant dense<0.000000e+00> : vector<2x8x128xf32>
    %6 = tpu.matmul %5, %1, %cst_7 {dimension_numbers = #tpu.dot_dimension_numbers<[2], [2], [1], [1], [0, 0, 0, 1, 1, 1], [0], [0]>} : vector<2x8x32xf32>, vector<2x128x32xf32>, vector<2x8x128xf32> -> vector<2x8x128xf32>
    %7 = tpu.iota {dimensions = array<i32: 2>} : vector<2x8x128xi32>
    %c8_i32 = arith.constant 8 : i32
    %8 = vector.broadcast %c8_i32 : i32 to vector<2x8x128xi32>
    %9 = arith.cmpi slt, %7, %8 : vector<2x8x128xi32>
    %cst_8 = arith.constant -1.000000e+30 : f32
    %10 = vector.broadcast %cst_8 : f32 to vector<2x8x128xf32>
    %11 = arith.select %9, %6, %10 : vector<2x8x128xi1>, vector<2x8x128xf32>
    %cst_9 = arith.constant dense<0xFF800000> : vector<2x8xf32>
    %12 = vector.multi_reduction <maximumf>, %11, %cst_9 [2] : vector<2x8x128xf32> to vector<2x8xf32>
    %13 = vector.shape_cast %12 : vector<2x8xf32> to vector<2x8x1xf32>
    %14 = vector.broadcast %13 : vector<2x8x1xf32> to vector<2x8x128xf32>
    %15 = arith.subf %11, %14 : vector<2x8x128xf32>
    %16 = math.exp %15 : vector<2x8x128xf32>
    %cst_10 = arith.constant dense<0.000000e+00> : vector<2x8xf32>
    %17 = vector.multi_reduction <add>, %16, %cst_10 [2] : vector<2x8x128xf32> to vector<2x8xf32>
    %18 = vector.shape_cast %17 : vector<2x8xf32> to vector<2x8x1xf32>
    %19 = tpu.reciprocal %18 {approx = true} : vector<2x8x1xf32> -> vector<2x8x1xf32>
    %20 = vector.broadcast %19 : vector<2x8x1xf32> to vector<2x8x128xf32>
    %21 = arith.mulf %16, %20 : vector<2x8x128xf32>
    %cst_11 = arith.constant dense<0.000000e+00> : vector<2x8x32xf32>
    %22 = tpu.matmul %21, %1, %cst_11 {dimension_numbers = #tpu.dot_dimension_numbers<[2], [1], [1], [2], [0, 0, 0, 1, 1, 2], [0], [0]>} : vector<2x8x128xf32>, vector<2x128x32xf32>, vector<2x8x32xf32> -> vector<2x8x32xf32>
    %23 = vector.shape_cast %22 : vector<2x8x32xf32> to vector<16x32xf32>
    %c0_12 = arith.constant 0 : index
    %c0_13 = arith.constant 0 : index
    %24 = vector.load %arg4[%c0_12, %c0_13] : memref<64x32xf32, #tpu.memory_space<vmem>>, vector<32x32xf32>
    %cst_14 = arith.constant dense<0.000000e+00> : vector<16x32xf32>
    %25 = tpu.matmul %23, %24, %cst_14 {dimension_numbers = #tpu.dot_dimension_numbers<[1], [0], [0], [1], [0, 0, 1, 1], [], []>} : vector<16x32xf32>, vector<32x32xf32>, vector<16x32xf32> -> vector<16x32xf32>
    %c32 = arith.constant 32 : index
    %c0_15 = arith.constant 0 : index
    %26 = vector.load %arg4[%c32, %c0_15] : memref<64x32xf32, #tpu.memory_space<vmem>>, vector<32x32xf32>
    %cst_16 = arith.constant dense<0.000000e+00> : vector<16x32xf32>
    %27 = tpu.matmul %4, %26, %cst_16 {dimension_numbers = #tpu.dot_dimension_numbers<[1], [0], [0], [1], [0, 0, 1, 1], [], []>} : vector<16x32xf32>, vector<32x32xf32>, vector<16x32xf32> -> vector<16x32xf32>
    %28 = arith.addf %25, %27 : vector<16x32xf32>
    %29 = math.tanh %28 : vector<16x32xf32>
    %30 = vector.shape_cast %29 : vector<16x32xf32> to vector<2x8x32xf32>
    %c0_17 = arith.constant 0 : index
    %c0_18 = arith.constant 0 : index
    %c0_19 = arith.constant 0 : index
    %31 = vector.load %arg5[%c0_17, %c0_18, %c0_19] : memref<2x8x32xf32, #tpu.memory_space<vmem>>, vector<2x8x32xf32>
    tpu.vector_store %arg5[%c0_17, %c0_18, %c0_19], %30 {strides = array<i32>} : memref<2x8x32xf32, #tpu.memory_space<vmem>>, vector<2x8x32xf32>,
    %c0_20 = arith.constant 0 : index
    %c0_21 = arith.constant 0 : index
    %c0_22 = arith.constant 0 : index
    %32 = vector.load %arg6[%c0_20, %c0_21, %c0_22] : memref<2x8x128xf32, #tpu.memory_space<vmem>>, vector<2x8x128xf32>
    tpu.vector_store %arg6[%c0_20, %c0_21, %c0_22], %21 {strides = array<i32>} : memref<2x8x128xf32, #tpu.memory_space<vmem>>, vector<2x8x128xf32>,
    return
  }
  func.func @transform_0(%arg0: i32) -> (i32, i32, i32) {
    %c0_i32 = arith.constant 0 : i32
    %c0_i32_0 = arith.constant 0 : i32
    %c0_i32_1 = arith.constant 0 : i32
    return %arg0, %c0_i32, %c0_i32_0 : i32, i32, i32
  }
  func.func @transform_1(%arg0: i32) -> (i32, i32, i32) {
    %c0_i32 = arith.constant 0 : i32
    %c0_i32_0 = arith.constant 0 : i32
    %c0_i32_1 = arith.constant 0 : i32
    return %arg0, %c0_i32, %c0_i32_0 : i32, i32, i32
  }
  func.func @transform_2(%arg0: i32) -> (i32, i32) {
    %c0_i32 = arith.constant 0 : i32
    %c0_i32_0 = arith.constant 0 : i32
    %c0_i32_1 = arith.constant 0 : i32
    return %c0_i32, %c0_i32_0 : i32, i32
  }
  func.func @transform_3(%arg0: i32) -> (i32, i32) {
    %c0_i32 = arith.constant 0 : i32
    %c0_i32_0 = arith.constant 0 : i32
    %c0_i32_1 = arith.constant 0 : i32
    return %c0_i32, %c0_i32_0 : i32, i32
  }
  func.func @transform_4(%arg0: i32) -> (i32, i32, i32) {
    %c0_i32 = arith.constant 0 : i32
    %c0_i32_0 = arith.constant 0 : i32
    %c0_i32_1 = arith.constant 0 : i32
    return %arg0, %c0_i32, %c0_i32_0 : i32, i32, i32
  }
  func.func @transform_5(%arg0: i32) -> (i32, i32, i32) {
    %c0_i32 = arith.constant 0 : i32
    %c0_i32_0 = arith.constant 0 : i32
    %c0_i32_1 = arith.constant 0 : i32
    return %arg0, %c0_i32, %c0_i32_0 : i32, i32, i32
  }
}

</mosaic_0001>

<llo_original>
// kernel: tpu_custom_call.1
$region0: #{tpu_custom_call.1}
  #allocation0 [shape = 'u32[]', space=smem, size = 0x4, offset = 0x4, fixed_abs, tag = 'smem constant byte address 0x4 - core index']
  #allocation1 [shape = 'u32[144,128]{1,0:T(1,128)}', space=vmem, size = 0x12000, scoped, tag = 'internal scratch']
  %s0 = inlined_call_operand.vmem [shape: f32[2,8,32], index: 0, kind: input, shape index: {}]
  %s1 = inlined_call_operand.vmem [shape: f32[2,128,32], index: 1, kind: input, shape index: {}]
  %s2 = inlined_call_operand.vmem [shape: f32[32,32], index: 2, kind: input, shape index: {}]
  %s3 = inlined_call_operand.vmem [shape: f32[64,32], index: 3, kind: input, shape index: {}]
  %s4 = inlined_call_operand.hbm [shape: f32[2,8,32], index: 4, kind: output, shape index: {0}]
  %s5 = inlined_call_operand.hbm [shape: f32[2,8,128], index: 5, kind: output, shape index: {1}]
  %6 = xla_tuple %s4, %s5
  %s7 = sld [smem:[#allocation0]]
  $region34: #{tpu_custom_call.1} parent=0
    _
  %s9 = ssub.s32 1, %s7
  %s10 = scalar_select 0, %s9, %s7
  $region1: #{tpu_custom_call.1} parent=0
    #allocation2 [shape = 'u8[8192]{0}', space=vmem, size = 0x2000, scoped, tag = 'output window, operand 0, single buffered']
    #allocation3 [shape = 's32[1]{0}', space=sflag, size = 0x4, scoped, tag = 'scoped memory for tpu_custom_call.1']
    #allocation4 [shape = 'u8[8192]{0}', space=vmem, size = 0x2000, scoped, tag = 'output window, operand 1, single buffered']
    #allocation5 [shape = 's32[1]{0}', space=sflag, size = 0x4, scoped, tag = 'scoped memory for tpu_custom_call.1']
    %11 = vsyncpa [#allocation3], 0
    %12 = vsyncpa [#allocation5], 0
    // Predicated region
    $region2: #{tpu_custom_call.1} parent=1 // pred_check
      _
    $region3: #{tpu_custom_call.1} parent=1 // pred_check_branch
      %14 = sbr.rel (0) target = $region5
    $region4: #{tpu_custom_call.1} parent=1 // pred_region
      _
    $region5: #{tpu_custom_call.1} parent=1 // pred_fallthru
      _
    // Predicated region
    $region6: #{tpu_custom_call.1} parent=1 // pred_check
      _
    $region7: #{tpu_custom_call.1} parent=1 // pred_check_branch
      %16 = sbr.rel (0) target = $region9
    $region8: #{tpu_custom_call.1} parent=1 // pred_region
      _
    $region9: #{tpu_custom_call.1} parent=1 // pred_fallthru
      _
    // Predicated region
    $region10: #{tpu_custom_call.1} parent=1 // pred_check
      _
    $region11: #{tpu_custom_call.1} parent=1 // pred_check_branch
      %18 = sbr.rel (0) target = $region13
    $region12: #{tpu_custom_call.1} parent=1 // pred_region
      _
    $region13: #{tpu_custom_call.1} parent=1 // pred_fallthru
      _
    // Predicated region
    $region14: #{tpu_custom_call.1} parent=1 // pred_check
      _
    $region15: #{tpu_custom_call.1} parent=1 // pred_check_branch
      %20 = sbr.rel (0) target = $region17
    $region16: #{tpu_custom_call.1} parent=1 // pred_region
      _
    $region17: #{tpu_custom_call.1} parent=1 // pred_fallthru
      _
    %v21 = vld [vmem:[%s0] sm:$0xff]
    %v22 = vld [vmem:[%s0 + $0x8] sm:$0xff]
    %v23 = vld [vmem:[%s1] sm:$0xff]
    %v24 = vld [vmem:[%s1 + $0x8] sm:$0xff]
    %v25 = vld [vmem:[%s1 + $0x10] sm:$0xff]
    %v26 = vld [vmem:[%s1 + $0x18] sm:$0xff]
    %v27 = vld [vmem:[%s1 + $0x20] sm:$0xff]
    %v28 = vld [vmem:[%s1 + $0x28] sm:$0xff]
    %v29 = vld [vmem:[%s1 + $0x30] sm:$0xff]
    %v30 = vld [vmem:[%s1 + $0x38] sm:$0xff]
    %v31 = vld [vmem:[%s1 + $0x40] sm:$0xff]
    %v32 = vld [vmem:[%s1 + $0x48] sm:$0xff]
    %v33 = vld [vmem:[%s1 + $0x50] sm:$0xff]
    %v34 = vld [vmem:[%s1 + $0x58] sm:$0xff]
    %v35 = vld [vmem:[%s1 + $0x60] sm:$0xff]
    %v36 = vld [vmem:[%s1 + $0x68] sm:$0xff]
    %v37 = vld [vmem:[%s1 + $0x70] sm:$0xff]
    %v38 = vld [vmem:[%s1 + $0x78] sm:$0xff]
    %v39 = vld [vmem:[%s1 + $0x80] sm:$0xff]
    %v40 = vld [vmem:[%s1 + $0x88] sm:$0xff]
    %v41 = vld [vmem:[%s1 + $0x90] sm:$0xff]
    %v42 = vld [vmem:[%s1 + $0x98] sm:$0xff]
    %v43 = vld [vmem:[%s1 + $0xa0] sm:$0xff]
    %v44 = vld [vmem:[%s1 + $0xa8] sm:$0xff]
    %v45 = vld [vmem:[%s1 + $0xb0] sm:$0xff]
    %v46 = vld [vmem:[%s1 + $0xb8] sm:$0xff]
    %v47 = vld [vmem:[%s1 + $0xc0] sm:$0xff]
    %v48 = vld [vmem:[%s1 + $0xc8] sm:$0xff]
    %v49 = vld [vmem:[%s1 + $0xd0] sm:$0xff]
    %v50 = vld [vmem:[%s1 + $0xd8] sm:$0xff]
    %v51 = vld [vmem:[%s1 + $0xe0] sm:$0xff]
    %v52 = vld [vmem:[%s1 + $0xe8] sm:$0xff]
    %v53 = vld [vmem:[%s1 + $0xf0] sm:$0xff]
    %v54 = vld [vmem:[%s1 + $0xf8] sm:$0xff]
    %v55 = vld [vmem:[%s2] sm:$0xff]
    %v56 = vld [vmem:[%s2 + $0x8] sm:$0xff]
    %v57 = vld [vmem:[%s2 + $0x10] sm:$0xff]
    %v58 = vld [vmem:[%s2 + $0x18] sm:$0xff]
    %vm59 = vcmask 261120
    %v61 = vsel %vm59, %v21, 0
    %v64 = vsel %vm59, %v22, 0
    %66 = vmatprep.subr.mxu0 0.0
    %67 = vmatpush1.msra.mxu0 %v55
    %68 = vmatprep.subr.mxu0 0.0
    %69 = vmatpush1.msra.mxu0 %v56
    %70 = vmatprep.subr.mxu0 0.0
    %71 = vmatpush1.msra.mxu0 %v57
    %72 = vmatprep.subr.mxu0 0.0
    %73 = vmatpush1.msra.mxu0 %v58
    %74 = vmatprep.subr.mxu0 0.0
    %75 = vmatpush1.msra.mxu0 0.0
    %76 = vmatprep.subr.mxu0 0.0
    %77 = vmatpush1.msra.mxu0 0.0
    %78 = vmatprep.subr.mxu0 0.0
    %79 = vmatpush1.msra.mxu0 0.0
    %80 = vmatprep.subr.mxu0 0.0
    %81 = vmatpush1.msra.mxu0 0.0
    %82 = vmatprep.subr.mxu0 0.0
    %83 = vmatpush1.msra.mxu0 0.0
    %84 = vmatprep.subr.mxu0 0.0
    %85 = vmatpush1.msra.mxu0 0.0
    %86 = vmatprep.subr.mxu0 0.0
    %87 = vmatpush1.msra.mxu0 0.0
    %88 = vmatprep.subr.mxu0 0.0
    %89 = vmatpush1.msra.mxu0 0.0
    %90 = vmatprep.subr.mxu0 0.0
    %91 = vmatpush1.msra.mxu0 0.0
    %92 = vmatprep.subr.mxu0 0.0
    %93 = vmatpush1.msra.mxu0 0.0
    %94 = vmatprep.subr.mxu0 0.0
    %95 = vmatpush1.msra.mxu0 0.0
    %96 = vmatprep.subr.mxu0 0.0
    %97 = vmatpush1.msra.mxu0 0.0
    %98 = vmatprep.subr.mxu0 0.0
    %99 = vmatpush1.msra.mxu0 0.0
    %100 = vmatprep.subr.mxu0 0.0
    %101 = vmatpush1.msra.mxu0 0.0
    %102 = vmatprep.subr.mxu0 0.0
    %103 = vmatpush1.msra.mxu0 0.0
    %104 = vmatprep.subr.mxu0 0.0
    %105 = vmatpush1.msra.mxu0 0.0
    %106 = vmatprep.subr.mxu0 0.0
    %107 = vmatpush1.msra.mxu0 0.0
    %108 = vmatprep.subr.mxu0 0.0
    %109 = vmatpush1.msra.mxu0 0.0
    %110 = vmatprep.subr.mxu0 0.0
    %111 = vmatpush1.msra.mxu0 0.0
    %112 = vmatprep.subr.mxu0 0.0
    %113 = vmatpush1.msra.mxu0 0.0
    %114 = vmatprep.subr.mxu0 0.0
    %115 = vmatpush1.msra.mxu0 0.0
    %116 = vmatprep.subr.mxu0 0.0
    %117 = vmatpush1.msra.mxu0 0.0
    %118 = vmatprep.subr.mxu0 0.0
    %119 = vmatpush1.msra.mxu0 0.0
    %120 = vmatprep.subr.mxu0 0.0
    %121 = vmatpush1.msra.mxu0 0.0
    %122 = vmatprep.subr.mxu0 0.0
    %123 = vmatpush1.msra.mxu0 0.0
    %124 = vmatprep.subr.mxu0 0.0
    %125 = vmatpush1.msra.mxu0 0.0
    %126 = vmatprep.subr.mxu0 0.0
    %127 = vmatpush1.msra.mxu0 0.0
    %128 = vmatprep.subr.mxu0 0.0
    %129 = vmatpush1.msra.mxu0 0.0
    %130 = vmatprep.mubr.f32.mxu0 0.0
    %131 = vmatmul.mubr.f32.gmra.mrb[0].mxu0 %v61
    %v132 = vpop.f32.mrb[0].mxu0
    %v133 = vadd.f32 0.0, %v132
    %v134 = vpop.f32.mrb[0].mxu0
    %135 = vmatprep.mubr.f32.mxu0 0.0
    %136 = vmatmul.mubr.f32.gmra.mrb[0].mxu0 %v64
    %v137 = vpop.f32.mrb[0].mxu0
    %v138 = vadd.f32 0.0, %v137
    %v139 = vpop.f32.mrb[0].mxu0
    %140 = vdwg.mxu0
    %v142 = vsel %vm59, %v133, 0
    %v145 = vsel %vm59, %v23, 0
    %v148 = vsel %vm59, %v24, 0
    %v151 = vsel %vm59, %v25, 0
    %v154 = vsel %vm59, %v26, 0
    %v157 = vsel %vm59, %v27, 0
    %v160 = vsel %vm59, %v28, 0
    %v163 = vsel %vm59, %v29, 0
    %v166 = vsel %vm59, %v30, 0
    %v169 = vsel %vm59, %v31, 0
    %v172 = vsel %vm59, %v32, 0
    %v175 = vsel %vm59, %v33, 0
    %v178 = vsel %vm59, %v34, 0
    %v181 = vsel %vm59, %v35, 0
    %v184 = vsel %vm59, %v36, 0
    %v187 = vsel %vm59, %v37, 0
    %v190 = vsel %vm59, %v38, 0
    %192 = vmatprep.subr.mxu0 0.0
    %193 = vmatpush1.xpose.msra.mxu0 %v145
    %194 = vmatprep.subr.mxu0 0.0
    %195 = vmatpush1.xpose.msra.mxu0 %v148
    %196 = vmatprep.subr.mxu0 0.0
    %197 = vmatpush1.xpose.msra.mxu0 %v151
    %198 = vmatprep.subr.mxu0 0.0
    %199 = vmatpush1.xpose.msra.mxu0 %v154
    %200 = vmatprep.subr.mxu0 0.0
    %201 = vmatpush1.xpose.msra.mxu0 %v157
    %202 = vmatprep.subr.mxu0 0.0
    %203 = vmatpush1.xpose.msra.mxu0 %v160
    %204 = vmatprep.subr.mxu0 0.0
    %205 = vmatpush1.xpose.msra.mxu0 %v163
    %206 = vmatprep.subr.mxu0 0.0
    %207 = vmatpush1.xpose.msra.mxu0 %v166
    %208 = vmatprep.subr.mxu0 0.0
    %209 = vmatpush1.xpose.msra.mxu0 %v169
    %210 = vmatprep.subr.mxu0 0.0
    %211 = vmatpush1.xpose.msra.mxu0 %v172
    %212 = vmatprep.subr.mxu0 0.0
    %213 = vmatpush1.xpose.msra.mxu0 %v175
    %214 = vmatprep.subr.mxu0 0.0
    %215 = vmatpush1.xpose.msra.mxu0 %v178
    %216 = vmatprep.subr.mxu0 0.0
    %217 = vmatpush1.xpose.msra.mxu0 %v181
    %218 = vmatprep.subr.mxu0 0.0
    %219 = vmatpush1.xpose.msra.mxu0 %v184
    %220 = vmatprep.subr.mxu0 0.0
    %221 = vmatpush1.xpose.msra.mxu0 %v187
    %222 = vmatprep.subr.mxu0 0.0
    %223 = vmatpush1.xpose.msra.mxu0 %v190
    %224 = vmatprep.subr.mxu0 0.0
    %225 = vmatpush1.xpose.msra.mxu0 0.0
    %226 = vmatprep.subr.mxu0 0.0
    %227 = vmatpush1.xpose.msra.mxu0 0.0
    %228 = vmatprep.subr.mxu0 0.0
    %229 = vmatpush1.xpose.msra.mxu0 0.0
    %230 = vmatprep.subr.mxu0 0.0
    %231 = vmatpush1.xpose.msra.mxu0 0.0
    %232 = vmatprep.subr.mxu0 0.0
    %233 = vmatpush1.xpose.msra.mxu0 0.0
    %234 = vmatprep.subr.mxu0 0.0
    %235 = vmatpush1.xpose.msra.mxu0 0.0
    %236 = vmatprep.subr.mxu0 0.0
    %237 = vmatpush1.xpose.msra.mxu0 0.0
    %238 = vmatprep.subr.mxu0 0.0
    %239 = vmatpush1.xpose.msra.mxu0 0.0
    %240 = vmatprep.subr.mxu0 0.0
    %241 = vmatpush1.xpose.msra.mxu0 0.0
    %242 = vmatprep.subr.mxu0 0.0
    %243 = vmatpush1.xpose.msra.mxu0 0.0
    %244 = vmatprep.subr.mxu0 0.0
    %245 = vmatpush1.xpose.msra.mxu0 0.0
    %246 = vmatprep.subr.mxu0 0.0
    %247 = vmatpush1.xpose.msra.mxu0 0.0
    %248 = vmatprep.subr.mxu0 0.0
    %249 = vmatpush1.xpose.msra.mxu0 0.0
    %250 = vmatprep.subr.mxu0 0.0
    %251 = vmatpush1.xpose.msra.mxu0 0.0
    %252 = vmatprep.subr.mxu0 0.0
    %253 = vmatpush1.xpose.msra.mxu0 0.0
    %254 = vmatprep.subr.mxu0 0.0
    %255 = vmatpush1.xpose.msra.mxu0 0.0
    %256 = vmatprep.mubr.f32.mxu0 0.0
    %257 = vmatmul.mubr.f32.gmra.mrb[0].mxu0 %v142
    %v258 = vpop.f32.mrb[0].mxu0
    %v259 = vadd.f32 0.0, %v258
    %v260 = vpop.f32.mrb[0].mxu0
    %261 = vdwg.mxu0
    %v263 = vsel %vm59, %v138, 0
    %v266 = vsel %vm59, %v39, 0
    %v269 = vsel %vm59, %v40, 0
    %v272 = vsel %vm59, %v41, 0
    %v275 = vsel %vm59, %v42, 0
    %v278 = vsel %vm59, %v43, 0
    %v281 = vsel %vm59, %v44, 0
    %v284 = vsel %vm59, %v45, 0
    %v287 = vsel %vm59, %v46, 0
    %v290 = vsel %vm59, %v47, 0
    %v293 = vsel %vm59, %v48, 0
    %v296 = vsel %vm59, %v49, 0
    %v299 = vsel %vm59, %v50, 0
    %v302 = vsel %vm59, %v51, 0
    %v305 = vsel %vm59, %v52, 0
    %v308 = vsel %vm59, %v53, 0
    %v311 = vsel %vm59, %v54, 0
    %313 = vmatprep.subr.mxu0 0.0
    %314 = vmatpush1.xpose.msra.mxu0 %v266
    %315 = vmatprep.subr.mxu0 0.0
    %316 = vmatpush1.xpose.msra.mxu0 %v269
    %317 = vmatprep.subr.mxu0 0.0
    %318 = vmatpush1.xpose.msra.mxu0 %v272
    %319 = vmatprep.subr.mxu0 0.0
    %320 = vmatpush1.xpose.msra.mxu0 %v275
    %321 = vmatprep.subr.mxu0 0.0
    %322 = vmatpush1.xpose.msra.mxu0 %v278
    %323 = vmatprep.subr.mxu0 0.0
    %324 = vmatpush1.xpose.msra.mxu0 %v281
    %325 = vmatprep.subr.mxu0 0.0
    %326 = vmatpush1.xpose.msra.mxu0 %v284
    %327 = vmatprep.subr.mxu0 0.0
    %328 = vmatpush1.xpose.msra.mxu0 %v287
    %329 = vmatprep.subr.mxu0 0.0
    %330 = vmatpush1.xpose.msra.mxu0 %v290
    %331 = vmatprep.subr.mxu0 0.0
    %332 = vmatpush1.xpose.msra.mxu0 %v293
    %333 = vmatprep.subr.mxu0 0.0
    %334 = vmatpush1.xpose.msra.mxu0 %v296
    %335 = vmatprep.subr.mxu0 0.0
    %336 = vmatpush1.xpose.msra.mxu0 %v299
    %337 = vmatprep.subr.mxu0 0.0
    %338 = vmatpush1.xpose.msra.mxu0 %v302
    %339 = vmatprep.subr.mxu0 0.0
    %340 = vmatpush1.xpose.msra.mxu0 %v305
    %341 = vmatprep.subr.mxu0 0.0
    %342 = vmatpush1.xpose.msra.mxu0 %v308
    %343 = vmatprep.subr.mxu0 0.0
    %344 = vmatpush1.xpose.msra.mxu0 %v311
    %345 = vmatprep.subr.mxu0 0.0
    %346 = vmatpush1.xpose.msra.mxu0 0.0
    %347 = vmatprep.subr.mxu0 0.0
    %348 = vmatpush1.xpose.msra.mxu0 0.0
    %349 = vmatprep.subr.mxu0 0.0
    %350 = vmatpush1.xpose.msra.mxu0 0.0
    %351 = vmatprep.subr.mxu0 0.0
    %352 = vmatpush1.xpose.msra.mxu0 0.0
    %353 = vmatprep.subr.mxu0 0.0
    %354 = vmatpush1.xpose.msra.mxu0 0.0
    %355 = vmatprep.subr.mxu0 0.0
    %356 = vmatpush1.xpose.msra.mxu0 0.0
    %357 = vmatprep.subr.mxu0 0.0
    %358 = vmatpush1.xpose.msra.mxu0 0.0
    %359 = vmatprep.subr.mxu0 0.0
    %360 = vmatpush1.xpose.msra.mxu0 0.0
    %361 = vmatprep.subr.mxu0 0.0
    %362 = vmatpush1.xpose.msra.mxu0 0.0
    %363 = vmatprep.subr.mxu0 0.0
    %364 = vmatpush1.xpose.msra.mxu0 0.0
    %365 = vmatprep.subr.mxu0 0.0
    %366 = vmatpush1.xpose.msra.mxu0 0.0
    %367 = vmatprep.subr.mxu0 0.0
    %368 = vmatpush1.xpose.msra.mxu0 0.0
    %369 = vmatprep.subr.mxu0 0.0
    %370 = vmatpush1.xpose.msra.mxu0 0.0
    %371 = vmatprep.subr.mxu0 0.0
    %372 = vmatpush1.xpose.msra.mxu0 0.0
    %373 = vmatprep.subr.mxu0 0.0
    %374 = vmatpush1.xpose.msra.mxu0 0.0
    %375 = vmatprep.subr.mxu0 0.0
    %376 = vmatpush1.xpose.msra.mxu0 0.0
    %377 = vmatprep.mubr.f32.mxu0 0.0
    %378 = vmatmul.mubr.f32.gmra.mrb[0].mxu0 %v263
    %v379 = vpop.f32.mrb[0].mxu0
    %v380 = vadd.f32 0.0, %v379
    %v381 = vpop.f32.mrb[0].mxu0
    %382 = vdwg.mxu0
    %v383 = vlaneseq
    %v384 = vand.u32 %v383, 127
    %vm385 = vcmp.lt.s32.totalorder %v384, 8
    %v386 = vsel %vm385, %v259, -1e+30
    %v387 = vsel %vm385, %v380, -1e+30
    %388 = vmax.xlane.f32.xlu0 %v386
    %v389 = vpop.xlane.xlu0 %388
    %390 = vmax.xlane.f32.xlu0 %v387
    %v391 = vpop.xlane.xlu0 %390
    %v392 = vsub.f32 %v386, %v389
    %v393 = vsub.f32 %v387, %v391
    %v394 = vmul.f32 %v392, 1.442695
    %v395 = vpow.pop %v394
    %v396 = vmul.f32 %v393, 1.442695
    %v397 = vpow.pop %v396
    %398 = vadd.xlane.f32.xlu0 %v395
    %v399 = vpop.xlane.xlu0 %398
    %400 = vadd.xlane.f32.xlu0 %v397
    %v401 = vpop.xlane.xlu0 %400
    %v402 = vrcp.pop %v399
    %v403 = vrcp.pop %v401
    %v404 = vmul.f32 %v395, %v402
    %v405 = vmul.f32 %v397, %v403
    %406 = vmatprep.subr.mxu0 0.0
    %407 = vmatpush1.msra.mxu0 %v23
    %408 = vmatprep.subr.mxu0 0.0
    %409 = vmatpush1.msra.mxu0 %v24
    %410 = vmatprep.subr.mxu0 0.0
    %411 = vmatpush1.msra.mxu0 %v25
    %412 = vmatprep.subr.mxu0 0.0
    %413 = vmatpush1.msra.mxu0 %v26
    %414 = vmatprep.subr.mxu0 0.0
    %415 = vmatpush1.msra.mxu0 %v27
    %416 = vmatprep.subr.mxu0 0.0
    %417 = vmatpush1.msra.mxu0 %v28
    %418 = vmatprep.subr.mxu0 0.0
    %419 = vmatpush1.msra.mxu0 %v29
    %420 = vmatprep.subr.mxu0 0.0
    %421 = vmatpush1.msra.mxu0 %v30
    %422 = vmatprep.subr.mxu0 0.0
    %423 = vmatpush1.msra.mxu0 %v31
    %424 = vmatprep.subr.mxu0 0.0
    %425 = vmatpush1.msra.mxu0 %v32
    %426 = vmatprep.subr.mxu0 0.0
    %427 = vmatpush1.msra.mxu0 %v33
    %428 = vmatprep.subr.mxu0 0.0
    %429 = vmatpush1.msra.mxu0 %v34
    %430 = vmatprep.subr.mxu0 0.0
    %431 = vmatpush1.msra.mxu0 %v35
    %432 = vmatprep.subr.mxu0 0.0
    %433 = vmatpush1.msra.mxu0 %v36
    %434 = vmatprep.subr.mxu0 0.0
    %435 = vmatpush1.msra.mxu0 %v37
    %436 = vmatprep.subr.mxu0 0.0
    %437 = vmatpush1.msra.mxu0 %v38
    %438 = vmatprep.subr.mxu0 0.0
    %439 = vmatpush1.msra.mxu0 0.0
    %440 = vmatprep.subr.mxu0 0.0
    %441 = vmatpush1.msra.mxu0 0.0
    %442 = vmatprep.subr.mxu0 0.0
    %443 = vmatpush1.msra.mxu0 0.0
    %444 = vmatprep.subr.mxu0 0.0
    %445 = vmatpush1.msra.mxu0 0.0
    %446 = vmatprep.subr.mxu0 0.0
    %447 = vmatpush1.msra.mxu0 0.0
    %448 = vmatprep.subr.mxu0 0.0
    %449 = vmatpush1.msra.mxu0 0.0
    %450 = vmatprep.subr.mxu0 0.0
    %451 = vmatpush1.msra.mxu0 0.0
    %452 = vmatprep.subr.mxu0 0.0
    %453 = vmatpush1.msra.mxu0 0.0
    %454 = vmatprep.subr.mxu0 0.0
    %455 = vmatpush1.msra.mxu0 0.0
    %456 = vmatprep.subr.mxu0 0.0
    %457 = vmatpush1.msra.mxu0 0.0
    %458 = vmatprep.subr.mxu0 0.0
    %459 = vmatpush1.msra.mxu0 0.0
    %460 = vmatprep.subr.mxu0 0.0
    %461 = vmatpush1.msra.mxu0 0.0
    %462 = vmatprep.subr.mxu0 0.0
    %463 = vmatpush1.msra.mxu0 0.0
    %464 = vmatprep.subr.mxu0 0.0
    %465 = vmatpush1.msra.mxu0 0.0
    %466 = vmatprep.subr.mxu0 0.0
    %467 = vmatpush1.msra.mxu0 0.0
    %468 = vmatprep.subr.mxu0 0.0
    %469 = vmatpush1.msra.mxu0 0.0
    %470 = vmatprep.mubr.f32.mxu0 0.0
    %471 = vmatmul.mubr.f32.gmra.mrb[0].mxu0 %v404
    %v472 = vpop.f32.mrb[0].mxu0
    %v473 = vadd.f32 0.0, %v472
    %v474 = vpop.f32.mrb[0].mxu0
    %475 = vdwg.mxu0
    %476 = vmatprep.subr.mxu0 0.0
    %477 = vmatpush1.msra.mxu0 %v39
    %478 = vmatprep.subr.mxu0 0.0
    %479 = vmatpush1.msra.mxu0 %v40
    %480 = vmatprep.subr.mxu0 0.0
    %481 = vmatpush1.msra.mxu0 %v41
    %482 = vmatprep.subr.mxu0 0.0
    %483 = vmatpush1.msra.mxu0 %v42
    %484 = vmatprep.subr.mxu0 0.0
    %485 = vmatpush1.msra.mxu0 %v43
    %486 = vmatprep.subr.mxu0 0.0
    %487 = vmatpush1.msra.mxu0 %v44
    %488 = vmatprep.subr.mxu0 0.0
    %489 = vmatpush1.msra.mxu0 %v45
    %490 = vmatprep.subr.mxu0 0.0
    %491 = vmatpush1.msra.mxu0 %v46
    %492 = vmatprep.subr.mxu0 0.0
    %493 = vmatpush1.msra.mxu0 %v47
    %494 = vmatprep.subr.mxu0 0.0
    %495 = vmatpush1.msra.mxu0 %v48
    %496 = vmatprep.subr.mxu0 0.0
    %497 = vmatpush1.msra.mxu0 %v49
    %498 = vmatprep.subr.mxu0 0.0
    %499 = vmatpush1.msra.mxu0 %v50
    %500 = vmatprep.subr.mxu0 0.0
    %501 = vmatpush1.msra.mxu0 %v51
    %502 = vmatprep.subr.mxu0 0.0
    %503 = vmatpush1.msra.mxu0 %v52
    %504 = vmatprep.subr.mxu0 0.0
    %505 = vmatpush1.msra.mxu0 %v53
    %506 = vmatprep.subr.mxu0 0.0
    %507 = vmatpush1.msra.mxu0 %v54
    %508 = vmatprep.subr.mxu0 0.0
    %509 = vmatpush1.msra.mxu0 0.0
    %510 = vmatprep.subr.mxu0 0.0
    %511 = vmatpush1.msra.mxu0 0.0
    %512 = vmatprep.subr.mxu0 0.0
    %513 = vmatpush1.msra.mxu0 0.0
    %514 = vmatprep.subr.mxu0 0.0
    %515 = vmatpush1.msra.mxu0 0.0
    %516 = vmatprep.subr.mxu0 0.0
    %517 = vmatpush1.msra.mxu0 0.0
    %518 = vmatprep.subr.mxu0 0.0
    %519 = vmatpush1.msra.mxu0 0.0
    %520 = vmatprep.subr.mxu0 0.0
    %521 = vmatpush1.msra.mxu0 0.0
    %522 = vmatprep.subr.mxu0 0.0
    %523 = vmatpush1.msra.mxu0 0.0
    %524 = vmatprep.subr.mxu0 0.0
    %525 = vmatpush1.msra.mxu0 0.0
    %526 = vmatprep.subr.mxu0 0.0
    %527 = vmatpush1.msra.mxu0 0.0
    %528 = vmatprep.subr.mxu0 0.0
    %529 = vmatpush1.msra.mxu0 0.0
    %530 = vmatprep.subr.mxu0 0.0
    %531 = vmatpush1.msra.mxu0 0.0
    %532 = vmatprep.subr.mxu0 0.0
    %533 = vmatpush1.msra.mxu0 0.0
    %534 = vmatprep.subr.mxu0 0.0
    %535 = vmatpush1.msra.mxu0 0.0
    %536 = vmatprep.subr.mxu0 0.0
    %537 = vmatpush1.msra.mxu0 0.0
    %538 = vmatprep.subr.mxu0 0.0
    %539 = vmatpush1.msra.mxu0 0.0
    %540 = vmatprep.mubr.f32.mxu0 0.0
    %541 = vmatmul.mubr.f32.gmra.mrb[0].mxu0 %v405
    %v542 = vpop.f32.mrb[0].mxu0
    %v543 = vadd.f32 0.0, %v542
    %v544 = vpop.f32.mrb[0].mxu0
    %545 = vdwg.mxu0
    %v546 = vld [vmem:[%s3] sm:$0xff]
    %v547 = vld [vmem:[%s3 + $0x8] sm:$0xff]
    %v548 = vld [vmem:[%s3 + $0x10] sm:$0xff]
    %v549 = vld [vmem:[%s3 + $0x18] sm:$0xff]
    %v550 = vld [vmem:[%s3 + $0x20] sm:$0xff]
    %v551 = vld [vmem:[%s3 + $0x28] sm:$0xff]
    %v552 = vld [vmem:[%s3 + $0x30] sm:$0xff]
    %v553 = vld [vmem:[%s3 + $0x38] sm:$0xff]
    %554 = vmatprep.subr.mxu0 0.0
    %555 = vmatpush1.msra.mxu0 %v550
    %556 = vmatprep.subr.mxu0 0.0
    %557 = vmatpush1.msra.mxu0 %v551
    %558 = vmatprep.subr.mxu0 0.0
    %559 = vmatpush1.msra.mxu0 %v552
    %560 = vmatprep.subr.mxu0 0.0
    %561 = vmatpush1.msra.mxu0 %v553
    %562 = vmatprep.subr.mxu0 0.0
    %563 = vmatpush1.msra.mxu0 0.0
    %564 = vmatprep.subr.mxu0 0.0
    %565 = vmatpush1.msra.mxu0 0.0
    %566 = vmatprep.subr.mxu0 0.0
    %567 = vmatpush1.msra.mxu0 0.0
    %568 = vmatprep.subr.mxu0 0.0
    %569 = vmatpush1.msra.mxu0 0.0
    %570 = vmatprep.subr.mxu0 0.0
    %571 = vmatpush1.msra.mxu0 0.0
    %572 = vmatprep.subr.mxu0 0.0
    %573 = vmatpush1.msra.mxu0 0.0
    %574 = vmatprep.subr.mxu0 0.0
    %575 = vmatpush1.msra.mxu0 0.0
    %576 = vmatprep.subr.mxu0 0.0
    %577 = vmatpush1.msra.mxu0 0.0
    %578 = vmatprep.subr.mxu0 0.0
    %579 = vmatpush1.msra.mxu0 0.0
    %580 = vmatprep.subr.mxu0 0.0
    %581 = vmatpush1.msra.mxu0 0.0
    %582 = vmatprep.subr.mxu0 0.0
    %583 = vmatpush1.msra.mxu0 0.0
    %584 = vmatprep.subr.mxu0 0.0
    %585 = vmatpush1.msra.mxu0 0.0
    %586 = vmatprep.subr.mxu0 0.0
    %587 = vmatpush1.msra.mxu0 0.0
    %588 = vmatprep.subr.mxu0 0.0
    %589 = vmatpush1.msra.mxu0 0.0
    %590 = vmatprep.subr.mxu0 0.0
    %591 = vmatpush1.msra.mxu0 0.0
    %592 = vmatprep.subr.mxu0 0.0
    %593 = vmatpush1.msra.mxu0 0.0
    %594 = vmatprep.subr.mxu0 0.0
    %595 = vmatpush1.msra.mxu0 0.0
    %596 = vmatprep.subr.mxu0 0.0
    %597 = vmatpush1.msra.mxu0 0.0
    %598 = vmatprep.subr.mxu0 0.0
    %599 = vmatpush1.msra.mxu0 0.0
    %600 = vmatprep.subr.mxu0 0.0
    %601 = vmatpush1.msra.mxu0 0.0
    %602 = vmatprep.subr.mxu0 0.0
    %603 = vmatpush1.msra.mxu0 0.0
    %604 = vmatprep.subr.mxu0 0.0
    %605 = vmatpush1.msra.mxu0 0.0
    %606 = vmatprep.subr.mxu0 0.0
    %607 = vmatpush1.msra.mxu0 0.0
    %608 = vmatprep.subr.mxu0 0.0
    %609 = vmatpush1.msra.mxu0 0.0
    %610 = vmatprep.subr.mxu0 0.0
    %611 = vmatpush1.msra.mxu0 0.0
    %612 = vmatprep.subr.mxu0 0.0
    %613 = vmatpush1.msra.mxu0 0.0
    %614 = vmatprep.subr.mxu0 0.0
    %615 = vmatpush1.msra.mxu0 0.0
    %616 = vmatprep.subr.mxu0 0.0
    %617 = vmatpush1.msra.mxu0 0.0
    %618 = vmatprep.mubr.f32.mxu0 0.0
    %619 = vmatmul.mubr.f32.gmra.mrb[0].mxu0 %v142
    %v620 = vpop.f32.mrb[0].mxu0
    %v621 = vadd.f32 0.0, %v620
    %v622 = vpop.f32.mrb[0].mxu0
    %623 = vmatprep.mubr.f32.mxu0 0.0
    %624 = vmatmul.mubr.f32.gmra.mrb[0].mxu0 %v263
    %v625 = vpop.f32.mrb[0].mxu0
    %v626 = vadd.f32 0.0, %v625
    %v627 = vpop.f32.mrb[0].mxu0
    %628 = vdwg.mxu0
    %v630 = vsel %vm59, %v473, 0
    %v633 = vsel %vm59, %v543, 0
    %635 = vmatprep.subr.mxu0 0.0
    %636 = vmatpush1.msra.mxu0 %v546
    %637 = vmatprep.subr.mxu0 0.0
    %638 = vmatpush1.msra.mxu0 %v547
    %639 = vmatprep.subr.mxu0 0.0
    %640 = vmatpush1.msra.mxu0 %v548
    %641 = vmatprep.subr.mxu0 0.0
    %642 = vmatpush1.msra.mxu0 %v549
    %643 = vmatprep.subr.mxu0 0.0
    %644 = vmatpush1.msra.mxu0 0.0
    %645 = vmatprep.subr.mxu0 0.0
    %646 = vmatpush1.msra.mxu0 0.0
    %647 = vmatprep.subr.mxu0 0.0
    %648 = vmatpush1.msra.mxu0 0.0
    %649 = vmatprep.subr.mxu0 0.0
    %650 = vmatpush1.msra.mxu0 0.0
    %651 = vmatprep.subr.mxu0 0.0
    %652 = vmatpush1.msra.mxu0 0.0
    %653 = vmatprep.subr.mxu0 0.0
    %654 = vmatpush1.msra.mxu0 0.0
    %655 = vmatprep.subr.mxu0 0.0
    %656 = vmatpush1.msra.mxu0 0.0
    %657 = vmatprep.subr.mxu0 0.0
    %658 = vmatpush1.msra.mxu0 0.0
    %659 = vmatprep.subr.mxu0 0.0
    %660 = vmatpush1.msra.mxu0 0.0
    %661 = vmatprep.subr.mxu0 0.0
    %662 = vmatpush1.msra.mxu0 0.0
    %663 = vmatprep.subr.mxu0 0.0
    %664 = vmatpush1.msra.mxu0 0.0
    %665 = vmatprep.subr.mxu0 0.0
    %666 = vmatpush1.msra.mxu0 0.0
    %667 = vmatprep.subr.mxu0 0.0
    %668 = vmatpush1.msra.mxu0 0.0
    %669 = vmatprep.subr.mxu0 0.0
    %670 = vmatpush1.msra.mxu0 0.0
    %671 = vmatprep.subr.mxu0 0.0
    %672 = vmatpush1.msra.mxu0 0.0
    %673 = vmatprep.subr.mxu0 0.0
    %674 = vmatpush1.msra.mxu0 0.0
    %675 = vmatprep.subr.mxu0 0.0
    %676 = vmatpush1.msra.mxu0 0.0
    %677 = vmatprep.subr.mxu0 0.0
    %678 = vmatpush1.msra.mxu0 0.0
    %679 = vmatprep.subr.mxu0 0.0
    %680 = vmatpush1.msra.mxu0 0.0
    %681 = vmatprep.subr.mxu0 0.0
    %682 = vmatpush1.msra.mxu0 0.0
    %683 = vmatprep.subr.mxu0 0.0
    %684 = vmatpush1.msra.mxu0 0.0
    %685 = vmatprep.subr.mxu0 0.0
    %686 = vmatpush1.msra.mxu0 0.0
    %687 = vmatprep.subr.mxu0 0.0
    %688 = vmatpush1.msra.mxu0 0.0
    %689 = vmatprep.subr.mxu0 0.0
    %690 = vmatpush1.msra.mxu0 0.0
    %691 = vmatprep.subr.mxu0 0.0
    %692 = vmatpush1.msra.mxu0 0.0
    %693 = vmatprep.subr.mxu0 0.0
    %694 = vmatpush1.msra.mxu0 0.0
    %695 = vmatprep.subr.mxu0 0.0
    %696 = vmatpush1.msra.mxu0 0.0
    %697 = vmatprep.subr.mxu0 0.0
    %698 = vmatpush1.msra.mxu0 0.0
    %699 = vmatprep.mubr.f32.mxu0 0.0
    %700 = vmatmul.mubr.f32.gmra.mrb[0].mxu0 %v630
    %v701 = vpop.f32.mrb[0].mxu0
    %v702 = vadd.f32 %v621, %v701
    %v703 = vpop.f32.mrb[0].mxu0
    %704 = vmatprep.mubr.f32.mxu0 0.0
    %705 = vmatmul.mubr.f32.gmra.mrb[0].mxu0 %v633
    %v706 = vpop.f32.mrb[0].mxu0
    %v707 = vadd.f32 %v626, %v706
    %v708 = vpop.f32.mrb[0].mxu0
    %709 = vdwg.mxu0
    %v710 = vtanh.pop %v702
    %v711 = vtanh.pop %v707
    %712 = vst.msk [vmem:[#allocation2] sm:$0xff] %vm59, %v710
    %713 = vst.msk [vmem:[#allocation2 + $0x8] sm:$0xff] %vm59, %v711
    %714 = vst [vmem:[#allocation4] sm:$0xff] %v404
    %715 = vst [vmem:[#allocation4 + $0x8] sm:$0xff] %v405
    // Predicated region
    $region18: #{tpu_custom_call.1} parent=1 // pred_check
      _
    $region19: #{tpu_custom_call.1} parent=1 // pred_check_branch
      %717 = sbr.rel (0) target = $region21
    $region20: #{tpu_custom_call.1} parent=1 // pred_region
      %s719 = ssub.s32 256, 256
      %720 = vsyncadd [#allocation3], %s719
      %s721 = sshll.u32 [#allocation2], 4
      %s722 = int_to_ptr.vmem [resolvable:$true] %s721
      %727 = dma.vmem_to_hbm [thread:$0]  %s722, 256, %s4, [#allocation3], 128, 128, 8
    $region21: #{tpu_custom_call.1} parent=1 // pred_fallthru
      _
    // Predicated region
    $region22: #{tpu_custom_call.1} parent=1 // pred_check
      _
    $region23: #{tpu_custom_call.1} parent=1 // pred_check_branch
      %729 = sbr.rel (0) target = $region25
    $region24: #{tpu_custom_call.1} parent=1 // pred_region
      %s731 = ssub.s32 256, 256
      %732 = vsyncadd [#allocation5], %s731
      %s733 = sshll.u32 [#allocation4], 4
      %s734 = int_to_ptr.vmem [resolvable:$true] %s733
      %739 = dma.vmem_to_hbm [thread:$0]  %s734, 256, %s5, [#allocation5], 128, 128, 8
    $region25: #{tpu_custom_call.1} parent=1 // pred_fallthru
      _
    // Predicated region
    $region26: #{tpu_custom_call.1} parent=1 // pred_check
      _
    $region27: #{tpu_custom_call.1} parent=1 // pred_check_branch
      %741 = sbr.rel (0) target = $region29
    $region28: #{tpu_custom_call.1} parent=1 // pred_region
      %742 = dma.done [#allocation3], 256
    $region29: #{tpu_custom_call.1} parent=1 // pred_fallthru
      _
    // Predicated region
    $region30: #{tpu_custom_call.1} parent=1 // pred_check
      _
    $region31: #{tpu_custom_call.1} parent=1 // pred_check_branch
      %744 = sbr.rel (0) target = $region33
    $region32: #{tpu_custom_call.1} parent=1 // pred_region
      %745 = dma.done [#allocation5], 256
    $region33: #{tpu_custom_call.1} parent=1 // pred_fallthru
      _
    %746 = vsyncpa [#allocation3], 1
    %747 = vsyncpa [#allocation5], 1

</llo_original>
